<compile_context>
chip_gen: v7x
topology: tpu7x:2x2x1
jax: 0.10.0
libtpu: 0.0.40
codegen_flags: <defaults>
</compile_context>

<pallas_src>
import functools

import jax
import jax.numpy as jnp
from jax.experimental import pallas as pl
from jax.experimental.pallas import tpu as pltpu


# ----------------------------------------------------------------------------
# Kernel 1: fused per-node projection + attention scores (one MXU matmul).
# ----------------------------------------------------------------------------
def project_kernel(x_ref, wbig_ref, h_ref, s_ref, *, heads, out_ch):
    """y = x @ [W | W@a_src | W@a_dst]; split into per-head h and scores."""
    y = jnp.dot(x_ref[...].astype(jnp.bfloat16), wbig_ref[...],
                preferred_element_type=jnp.float32)          # [tr, H*C + 2H]
    d = heads * out_ch
    for hd in range(heads):                                  # static, small H
        h_ref[hd] = y[:, hd * out_ch:(hd + 1) * out_ch].astype(jnp.bfloat16)
    s_ref[...] = y[:, d:]                                    # [tr, 2H] f32


# ----------------------------------------------------------------------------
# Kernel 2: masked-softmax attention + aggregation.
# Grid = (dst tiles ["parallel"], src tiles ["arbitrary"]); flash-style online
# softmax with running (m, l, acc) in VMEM scratch.  Output node-major [td, H*C]
# (lane-dense store), written once on the last src step.
# ----------------------------------------------------------------------------
def gat_attn_kernel(h_ref, a_src_ref, a_dst_ref, bias_ref, b_ref, out_ref,
                    m_ref, l_ref, acc_ref, *, heads, out_ch, neg_slope,
                    apply_relu):
    j = pl.program_id(1)

    @pl.when(j == 0)
    def _():
        m_ref[...] = jnp.full_like(m_ref, -jnp.inf)
        l_ref[...] = jnp.zeros_like(l_ref)
        acc_ref[...] = jnp.zeros_like(acc_ref)

    for hd in range(heads):                                  # static, small H
        # Mask is pre-folded into bias (-1e30 on non-edges, bf16); self loops
        # guarantee every dst row sees at least one real edge across src tiles,
        # and the online-softmax rescale wipes contributions of all-masked tiles.
        logits = (a_dst_ref[hd] + a_src_ref[hd]
                  + bias_ref[hd].astype(jnp.float32))        # [td, ts]
        logits = jnp.maximum(logits, neg_slope * logits)     # leaky relu
        m_prev = m_ref[hd]
        m_new = jnp.maximum(m_prev, jnp.max(logits, axis=-1, keepdims=True))
        corr = jnp.exp(m_prev - m_new)
        p = jnp.exp(logits - m_new)
        l_ref[hd] = corr * l_ref[hd] + jnp.sum(p, axis=-1, keepdims=True)
        acc_ref[hd] = corr * acc_ref[hd] + jnp.dot(
            p.astype(jnp.bfloat16), h_ref[hd],
            preferred_element_type=jnp.float32)              # [td, C]
        m_ref[hd] = m_new

    @pl.when(j == pl.num_programs(1) - 1)
    def _():
        for hd in range(heads):                              # static column slices
            agg = acc_ref[hd] * pl.reciprocal(l_ref[hd], approx=True)
            agg = agg + b_ref[:, hd * out_ch:(hd + 1) * out_ch]
            if apply_relu:
                agg = jnp.maximum(agg, 0.0)
            out_ref[:, hd * out_ch:(hd + 1) * out_ch] = agg


# ----------------------------------------------------------------------------
# Kernel 3: global_mean_pool (tiled averaging matmul over N) + final Linear.
# ----------------------------------------------------------------------------
def pool_fc_kernel(pool_ref, x_ref, wfc_ref, bfc_ref, out_ref, acc_ref):
    k = pl.program_id(0)

    @pl.when(k == 0)
    def _():
        acc_ref[...] = jnp.zeros_like(acc_ref)

    acc_ref[...] += jnp.dot(pool_ref[...].astype(jnp.bfloat16),
                            x_ref[...].astype(jnp.bfloat16),
                            preferred_element_type=jnp.float32)   # [B, H*C]

    @pl.when(k == pl.num_programs(0) - 1)
    def _():
        out_ref[...] = (jnp.dot(acc_ref[...].astype(jnp.bfloat16),
                                wfc_ref[...].astype(jnp.bfloat16),
                                preferred_element_type=jnp.float32)
                        + bfc_ref[...])


# ----------------------------------------------------------------------------
# Tile helpers
# ----------------------------------------------------------------------------
def _pick_tile(n, target, multiple=8):
    """Largest tile <= target that divides n and is a multiple of `multiple`."""
    if n % multiple:
        return n
    t = max((min(target, n) // multiple) * multiple, multiple)
    while n % t:
        t -= multiple
    return t


def _pick_lane_tile(n, target):
    """Largest lane-dim tile: multiple of 128 dividing n, or the full dim."""
    if n % 128 == 0 and n >= 128:
        t = max((min(target, n) // 128) * 128, 128)
        while n % t:
            t -= 128
        return t
    return n


_VMEM_LIMIT = 48 * 1024 * 1024   # fits v7x's 64 MiB physical; conservative on v5e/v6e


# ----------------------------------------------------------------------------
# Wrappers
# ----------------------------------------------------------------------------
def gat_conv_layer(x, w, att_src, att_dst, bias, bias_e, *, heads, out_ch,
                   apply_relu=True, tile_rows=None, tile_dst=None,
                   tile_src=None):
    """One dense GATConv layer (+bias, +ReLU) as two tiled Pallas kernels."""
    n, f_in = x.shape
    d = heads * out_ch

    # Fused weight: [W | W@a_src | W@a_dst]  -> [F_in, D + 2H], bf16 MXU operand.
    w_heads = w.reshape(f_in, heads, out_ch)
    w_src = jnp.einsum('fhc,hc->fh', w_heads, att_src)          # [F_in, H]
    w_dst = jnp.einsum('fhc,hc->fh', w_heads, att_dst)          # [F_in, H]
    w_big = jnp.concatenate([w, w_src, w_dst], axis=1).astype(jnp.bfloat16)

    tr = _pick_tile(n, tile_rows or 256, multiple=16)   # projection row tile
    td = _pick_tile(n, tile_dst or 256, multiple=16)    # dst-node tile
    ts = _pick_lane_tile(n, tile_src or 512)            # src-node tile (lane dim)

    # ---- fused projection + attention-score kernel (grid over row tiles) ----
    h_hm, scores = pl.pallas_call(
        functools.partial(project_kernel, heads=heads, out_ch=out_ch),
        grid=(n // tr,),
        in_specs=[
            pl.BlockSpec((tr, f_in), lambda i: (i, 0)),
            pl.BlockSpec((f_in, d + 2 * heads), lambda i: (0, 0)),
        ],
        out_specs=(
            pl.BlockSpec((heads, tr, out_ch), lambda i: (0, i, 0)),
            pl.BlockSpec((tr, 2 * heads), lambda i: (i, 0)),
        ),
        out_shape=(
            jax.ShapeDtypeStruct((heads, n, out_ch), jnp.bfloat16),
            jax.ShapeDtypeStruct((n, 2 * heads), jnp.float32),
        ),
        compiler_params=pltpu.CompilerParams(
            dimension_semantics=("parallel",),
            vmem_limit_bytes=_VMEM_LIMIT),
    )(x, w_big)

    # Tiny layout plumbing (N*H elements) so the attention kernel needs no
    # transposes / width-2 lane slices.
    a_src = scores[:, :heads].T.reshape(heads, 1, n)            # [H, 1, N]
    a_dst = scores[:, heads:].T.reshape(heads, n, 1)            # [H, N, 1]
    b_nm = bias.reshape(1, d)

    # ---- online-softmax attention + aggregation (dst tiles x src tiles) ----
    out = pl.pallas_call(
        functools.partial(gat_attn_kernel, heads=heads, out_ch=out_ch,
                          neg_slope=0.2, apply_relu=apply_relu),
        grid=(n // td, n // ts),
        in_specs=[
            pl.BlockSpec((heads, ts, out_ch), lambda i, j: (0, j, 0)),  # h (src tile)
            pl.BlockSpec((heads, 1, ts), lambda i, j: (0, 0, j)),       # a_src
            pl.BlockSpec((heads, td, 1), lambda i, j: (0, i, 0)),       # a_dst
            pl.BlockSpec((heads, td, ts), lambda i, j: (0, i, j)),      # bias (bf16)
            pl.BlockSpec((1, d), lambda i, j: (0, 0)),                  # conv bias
        ],
        out_specs=pl.BlockSpec((td, d), lambda i, j: (i, 0)),           # node-major
        out_shape=jax.ShapeDtypeStruct((n, d), jnp.float32),
        scratch_shapes=[
            pltpu.VMEM((heads, td, 1), jnp.float32),       # running max
            pltpu.VMEM((heads, td, 1), jnp.float32),       # running sum
            pltpu.VMEM((heads, td, out_ch), jnp.float32),  # running acc
        ],
        compiler_params=pltpu.CompilerParams(
            dimension_semantics=("parallel", "arbitrary"),
            vmem_limit_bytes=_VMEM_LIMIT),
    )(h_hm, a_src, a_dst, bias_e, b_nm)
    return out


def pool_fc(x, pool, w_fc, b_fc, *, tile_n=None):
    b, n = pool.shape
    d = x.shape[1]
    nc = w_fc.shape[1]
    tn = _pick_lane_tile(n, tile_n or 512)
    return pl.pallas_call(
        pool_fc_kernel,
        grid=(n // tn,),
        in_specs=[
            pl.BlockSpec((b, tn), lambda k: (0, k)),
            pl.BlockSpec((tn, d), lambda k: (k, 0)),
            pl.BlockSpec((d, nc), lambda k: (0, 0)),
            pl.BlockSpec((1, nc), lambda k: (0, 0)),
        ],
        out_specs=pl.BlockSpec((b, nc), lambda k: (0, 0)),
        out_shape=jax.ShapeDtypeStruct((b, nc), jnp.float32),
        scratch_shapes=[pltpu.VMEM((b, d), jnp.float32)],
        compiler_params=pltpu.CompilerParams(
            dimension_semantics=("arbitrary",),
            vmem_limit_bytes=_VMEM_LIMIT),
    )(pool, x, w_fc, b_fc)


# ----------------------------------------------------------------------------
# JAX glue: dense edge-attention bias (mask folded in, bf16), scatter-free.
# ----------------------------------------------------------------------------
def edge_bias_dense(edge_index, edge_attr, w_edge, att_edge, n_nodes):
    """bias[h, i, j] = edge-attention logit of edge j->i (incl. 'mean'-filled
    self loops), -1e30 where no edge.  Returned bf16 (dominant HBM stream)."""
    src, dst = edge_index[0], edge_index[1]
    e = src.shape[0]
    heads, c = att_edge.shape
    iota = jnp.arange(n_nodes, dtype=src.dtype)
    oh_dst = (dst[None, :] == iota[:, None]).astype(jnp.float32)    # [N, E]
    oh_src = (src[None, :] == iota[:, None]).astype(jnp.float32)    # [N, E]

    # fill_value='mean': self-loop edge_attr = mean of incoming edge attrs.
    counts = oh_dst.sum(axis=1, keepdims=True)                      # [N, 1]
    loop_attr = (oh_dst @ edge_attr) / jnp.maximum(counts, 1.0)     # [N, De]

    attr_all = jnp.concatenate([edge_attr, loop_attr], axis=0)      # [E+N, De]
    he = (attr_all @ w_edge).reshape(-1, heads, c)                  # [E+N, H, C]
    a_e = jnp.einsum('ehc,hc->eh', he, att_edge)                    # [E+N, H]

    dense = jnp.einsum('ie,eh,je->hij', oh_dst, a_e[:e], oh_src)    # [H, N, N]
    eye = jnp.eye(n_nodes, dtype=jnp.float32)
    dense = dense + a_e[e:].T[:, :, None] * eye[None]               # self loops
    adj = oh_dst @ oh_src.T + eye                                   # edge counts
    # -1e30 sentinel is representable in bf16 (do NOT use fp16/fp8 here).
    return jnp.where(adj[None] > 0, dense, jnp.float32(-1e30)).astype(jnp.bfloat16)


# ----------------------------------------------------------------------------
# Full model forward
# ----------------------------------------------------------------------------
def gat_forward(params, x, edge_index, batch, edge_attr, *, heads, hidden,
                n_graphs, tile_rows=None, tile_dst=None, tile_src=None,
                tile_pool=None):
    n = x.shape[0]

    bias_e1 = edge_bias_dense(edge_index, edge_attr,
                              params['w_edge1'], params['att_edge1'], n)
    x1 = gat_conv_layer(x, params['w1'], params['att_src1'], params['att_dst1'],
                        params['bias1'], bias_e1, heads=heads, out_ch=hidden,
                        apply_relu=True, tile_rows=tile_rows, tile_dst=tile_dst,
                        tile_src=tile_src)
    # dropout(p=0.0) -> identity

    bias_e2 = edge_bias_dense(edge_index, edge_attr,
                              params['w_edge2'], params['att_edge2'], n)
    x2 = gat_conv_layer(x1, params['w2'], params['att_src2'], params['att_dst2'],
                        params['bias2'], bias_e2, heads=heads, out_ch=hidden,
                        apply_relu=True, tile_rows=tile_rows, tile_dst=tile_dst,
                        tile_src=tile_src)
    # dropout(p=0.0) -> identity

    onehot = (batch[None, :] == jnp.arange(n_graphs)[:, None]).astype(jnp.float32)
    pool = onehot / jnp.maximum(onehot.sum(axis=1, keepdims=True), 1.0)  # [B, N]
    return pool_fc(x2, pool, params['w_fc'], params['b_fc'], tile_n=tile_pool)


# ----------------------------------------------------------------------------
# Pure-JAX edge-list reference (mirrors PyG GATConv math) for validation.
# ----------------------------------------------------------------------------
def gat_conv_ref(x, w, att_src, att_dst, bias, w_edge, att_edge,
                 edge_index, edge_attr, heads, c):
    n = x.shape[0]
    h = (x @ w).reshape(n, heads, c)
    a_src = jnp.einsum('nhc,hc->nh', h, att_src)
    a_dst = jnp.einsum('nhc,hc->nh', h, att_dst)
    src, dst = edge_index[0], edge_index[1]

    counts = jnp.zeros((n,), jnp.float32).at[dst].add(1.0)
    sums = jnp.zeros((n, edge_attr.shape[1]), jnp.float32).at[dst].add(edge_attr)
    loop_attr = sums / jnp.maximum(counts, 1.0)[:, None]
    src_all = jnp.concatenate([src, jnp.arange(n, dtype=src.dtype)])
    dst_all = jnp.concatenate([dst, jnp.arange(n, dtype=dst.dtype)])
    attr_all = jnp.concatenate([edge_attr, loop_attr], axis=0)

    he = (attr_all @ w_edge).reshape(-1, heads, c)
    a_e = jnp.einsum('ehc,hc->eh', he, att_edge)

    alpha = a_src[src_all] + a_dst[dst_all] + a_e
    alpha = jnp.where(alpha >= 0, alpha, 0.2 * alpha)
    amax = jnp.full((n, heads), -jnp.inf, jnp.float32).at[dst_all].max(alpha)
    ex = jnp.exp(alpha - amax[dst_all])
    denom = jnp.zeros((n, heads), jnp.float32).at[dst_all].add(ex)
    coef = ex / denom[dst_all]
    out = jnp.zeros((n, heads, c), jnp.float32).at[dst_all].add(
        coef[:, :, None] * h[src_all])
    return out.reshape(n, heads * c) + bias


def gat_forward_ref(params, x, edge_index, batch, edge_attr, *,
                    heads, hidden, n_graphs):
    x1 = jnp.maximum(gat_conv_ref(x, params['w1'], params['att_src1'],
                                  params['att_dst1'], params['bias1'],
                                  params['w_edge1'], params['att_edge1'],
                                  edge_index, edge_attr, heads, hidden), 0.0)
    x2 = jnp.maximum(gat_conv_ref(x1, params['w2'], params['att_src2'],
                                  params['att_dst2'], params['bias2'],
                                  params['w_edge2'], params['att_edge2'],
                                  edge_index, edge_attr, heads, hidden), 0.0)
    onehot = (batch[None, :] == jnp.arange(n_graphs)[:, None]).astype(jnp.float32)
    pool = onehot / jnp.maximum(onehot.sum(axis=1, keepdims=True), 1.0)
    return (pool @ x2) @ params['w_fc'] + params['b_fc']


# ----------------------------------------------------------------------------
# Parameter init (deterministic, synthetic)
# ----------------------------------------------------------------------------
def init_params(key, f_in, hidden, n_classes, heads, e_dim):
    ks = jax.random.split(key, 14)

    def rnd(k, shape, scale=0.2):
        return jax.random.normal(k, shape, jnp.float32) * scale

    d = heads * hidden
    return dict(
        w1=rnd(ks[0], (f_in, d)),
        att_src1=rnd(ks[1], (heads, hidden)),
        att_dst1=rnd(ks[2], (heads, hidden)),
        att_edge1=rnd(ks[3], (heads, hidden)),
        w_edge1=rnd(ks[4], (e_dim, d)),
        bias1=rnd(ks[5], (1, d)),
        w2=rnd(ks[6], (d, d)),
        att_src2=rnd(ks[7], (heads, hidden)),
        att_dst2=rnd(ks[8], (heads, hidden)),
        att_edge2=rnd(ks[9], (heads, hidden)),
        w_edge2=rnd(ks[10], (e_dim, d)),
        bias2=rnd(ks[11], (1, d)),
        w_fc=rnd(ks[12], (d, n_classes)),
        b_fc=rnd(ks[13], (1, n_classes)),
    )


if __name__ == "__main__":
    n_input_features, hidden_dim, n_classes, n_heads, edge_dim = 4, 8, 3, 2, 3
    n_graphs, nodes_per_graph = 2, 128
    n_nodes = n_graphs * nodes_per_graph                      # 256 nodes

    key = jax.random.PRNGKey(0)
    kp, kx, ke = jax.random.split(key, 3)
    params = init_params(kp, n_input_features, hidden_dim, n_classes,
                         n_heads, edge_dim)

    # Node features [N, F_in]
    x = jax.random.normal(kx, (n_nodes, n_input_features), jnp.float32)

    # Directed ring edges per graph (no self loops; GATConv adds them itself).
    src, dst = [], []
    for g in range(n_graphs):
        base = g * nodes_per_graph
        for i in range(nodes_per_graph):
            jn = (i + 1) % nodes_per_graph
            src += [base + i, base + jn]
            dst += [base + jn, base + i]
    edge_index = jnp.array([src, dst], dtype=jnp.int32)             # [2, E]
    edge_attr = jax.random.normal(ke, (edge_index.shape[1], edge_dim),
                                  jnp.float32)
    batch = jnp.array([g for g in range(n_graphs)
                       for _ in range(nodes_per_graph)], dtype=jnp.int32)

    # Tiles chosen so every Pallas grid (rows, dst, src, pool) has >1 step,
    # exercising the online-softmax and accumulator paths.
    out = gat_forward(params, x, edge_index, batch, edge_attr,
                      heads=n_heads, hidden=hidden_dim, n_graphs=n_graphs,
                      tile_rows=128, tile_dst=64, tile_src=128, tile_pool=128)
    out = jax.block_until_ready(out)

    ref = gat_forward_ref(params, x, edge_index, batch, edge_attr,
                          heads=n_heads, hidden=hidden_dim, n_graphs=n_graphs)
    assert out.shape == (n_graphs, n_classes)
    # bf16 MXU operands + bf16 edge bias + approx reciprocal -> bf16 tolerance.
    assert jnp.allclose(out, ref, rtol=3e-2, atol=3e-2), (out, ref)

    print("KERNEL_OK")
</pallas_src>

<mosaic_0001>
module attributes {stable_mosaic.version = 11 : i64} {
  func.func @project_kernel(%arg0: i32, %arg1: memref<128x4xf32, #tpu.memory_space<vmem>>, %arg2: memref<4x20xbf16, #tpu.memory_space<vmem>>, %arg3: memref<2x128x8xbf16, #tpu.memory_space<vmem>>, %arg4: memref<128x4xf32, #tpu.memory_space<vmem>>) attributes {dimension_semantics = [#tpu.dimension_semantics<parallel>], iteration_bounds = array<i64: 2>, scalar_prefetch = 0 : i64, scratch_operands = 0 : i64, tpu.core_type = #tpu.core_type<tc>, window_params = [{transform_indices = @transform_0, window_bounds = array<i64: 128, 4>}, {pipeline_mode = #tpu.pipeline_mode<synchronous>, transform_indices = @transform_1, window_bounds = array<i64: 4, 20>}, {transform_indices = @transform_2, window_bounds = array<i64: 2, 128, 8>}, {transform_indices = @transform_3, window_bounds = array<i64: 128, 4>}]} {
    %c0 = arith.constant 0 : index
    %c0_0 = arith.constant 0 : index
    %0 = vector.load %arg1[%c0, %c0_0] : memref<128x4xf32, #tpu.memory_space<vmem>>, vector<128x4xf32>
    %1 = arith.truncf %0 : vector<128x4xf32> to vector<128x4xbf16>
    %c0_1 = arith.constant 0 : index
    %c0_2 = arith.constant 0 : index
    %2 = vector.load %arg2[%c0_1, %c0_2] : memref<4x20xbf16, #tpu.memory_space<vmem>>, vector<4x20xbf16>
    %cst = arith.constant dense<0.000000e+00> : vector<128x20xf32>
    %3 = tpu.matmul %1, %2, %cst {dimension_numbers = #tpu.dot_dimension_numbers<[1], [0], [0], [1], [0, 0, 1, 1], [], []>} : vector<128x4xbf16>, vector<4x20xbf16>, vector<128x20xf32> -> vector<128x20xf32>
    %4 = vector.extract_strided_slice %3 {offsets = [0, 0], sizes = [128, 8], strides = [1, 1]} : vector<128x20xf32> to vector<128x8xf32>
    %5 = arith.truncf %4 : vector<128x8xf32> to vector<128x8xbf16>
    %c0_3 = arith.constant 0 : index
    %c0_4 = arith.constant 0 : index
    %c0_5 = arith.constant 0 : index
    %6 = vector.load %arg3[%c0_3, %c0_4, %c0_5] : memref<2x128x8xbf16, #tpu.memory_space<vmem>>, vector<1x128x8xbf16>
    %7 = vector.shape_cast %6 : vector<1x128x8xbf16> to vector<128x8xbf16>
    %8 = vector.shape_cast %5 : vector<128x8xbf16> to vector<1x128x8xbf16>
    tpu.vector_store %arg3[%c0_3, %c0_4, %c0_5], %8 {strides = array<i32>} : memref<2x128x8xbf16, #tpu.memory_space<vmem>>, vector<1x128x8xbf16>,
    %9 = vector.extract_strided_slice %3 {offsets = [0, 8], sizes = [128, 8], strides = [1, 1]} : vector<128x20xf32> to vector<128x8xf32>
    %10 = arith.truncf %9 : vector<128x8xf32> to vector<128x8xbf16>
    %c1 = arith.constant 1 : index
    %c0_6 = arith.constant 0 : index
    %c0_7 = arith.constant 0 : index
    %11 = vector.load %arg3[%c1, %c0_6, %c0_7] : memref<2x128x8xbf16, #tpu.memory_space<vmem>>, vector<1x128x8xbf16>
    %12 = vector.shape_cast %11 : vector<1x128x8xbf16> to vector<128x8xbf16>
    %13 = vector.shape_cast %10 : vector<128x8xbf16> to vector<1x128x8xbf16>
    tpu.vector_store %arg3[%c1, %c0_6, %c0_7], %13 {strides = array<i32>} : memref<2x128x8xbf16, #tpu.memory_space<vmem>>, vector<1x128x8xbf16>,
    %14 = vector.extract_strided_slice %3 {offsets = [0, 16], sizes = [128, 4], strides = [1, 1]} : vector<128x20xf32> to vector<128x4xf32>
    %c0_8 = arith.constant 0 : index
    %c0_9 = arith.constant 0 : index
    %15 = vector.load %arg4[%c0_8, %c0_9] : memref<128x4xf32, #tpu.memory_space<vmem>>, vector<128x4xf32>
    tpu.vector_store %arg4[%c0_8, %c0_9], %14 {strides = array<i32>} : memref<128x4xf32, #tpu.memory_space<vmem>>, vector<128x4xf32>,
    return
  }
  func.func @transform_0(%arg0: i32) -> (i32, i32) {
    %c0_i32 = arith.constant 0 : i32
    %c0_i32_0 = arith.constant 0 : i32
    return %arg0, %c0_i32 : i32, i32
  }
  func.func @transform_1(%arg0: i32) -> (i32, i32) {
    %c0_i32 = arith.constant 0 : i32
    %c0_i32_0 = arith.constant 0 : i32
    %c0_i32_1 = arith.constant 0 : i32
    return %c0_i32, %c0_i32_0 : i32, i32
  }
  func.func @transform_2(%arg0: i32) -> (i32, i32, i32) {
    %c0_i32 = arith.constant 0 : i32
    %c0_i32_0 = arith.constant 0 : i32
    %c0_i32_1 = arith.constant 0 : i32
    return %c0_i32, %arg0, %c0_i32_0 : i32, i32, i32
  }
  func.func @transform_3(%arg0: i32) -> (i32, i32) {
    %c0_i32 = arith.constant 0 : i32
    %c0_i32_0 = arith.constant 0 : i32
    return %arg0, %c0_i32 : i32, i32
  }
}

</mosaic_0001>

<llo_original>
// kernel: tpu_custom_call.1
$region0: #{tpu_custom_call.1}
  #allocation0 [shape = 'u32[]', space=smem, size = 0x4, offset = 0x4, fixed_abs, tag = 'smem constant byte address 0x4 - core index']
  #allocation1 [shape = 'u32[144,128]{1,0:T(1,128)}', space=vmem, size = 0x12000, scoped, tag = 'internal scratch']
  %s0 = inlined_call_operand.vmem [shape: f32[256,4], index: 0, kind: input, shape index: {}]
  %s1 = inlined_call_operand.vmem [shape: bf16[4,20], index: 1, kind: input, shape index: {}]
  %s2 = inlined_call_operand.vmem [shape: bf16[2,256,8], index: 2, kind: output, shape index: {0}]
  %s3 = inlined_call_operand.vmem [shape: f32[256,4], index: 3, kind: output, shape index: {1}]
  %4 = xla_tuple %s2, %s3
  %s5 = sld [smem:[#allocation0]]
  $region86: #{tpu_custom_call.1} parent=0
    _
  %s7 = ssub.s32 1, %s5
  %s8 = scalar_select 0, %s7, %s5
  $region1: #{tpu_custom_call.1} parent=0
    #allocation2 [shape = 'u8[131072]{0}', space=vmem, size = 0x20000, scoped, tag = 'output window, operand 0']
    loop: start=0, step=1, limit=4
    $region2: #{tpu_custom_call.1} parent=1 // loop_pre_header
      _
    $region3: #{tpu_custom_call.1} parent=1 // loop_header
      %s10 = sphi 0, %s14
      %p11 = scmp.ge.s32.totalorder %s10, 4
      %s20 = sphi 0, %s22
      %s23 = sphi 0, %s20
      %s24 = sphi 0, %s23
      %s40 = sphi 0, %s24
      %s44 = sphi 0, %s44
      %s46 = sphi 0, %s44
      %s47 = sphi 0, %s46
      %s61 = sphi 0, %s47
      %s67 = sphi 0, %s69
      %s70 = sphi 0, %s67
      %s71 = sphi 0, %s70
      %s87 = sphi 0, %s71
      %s93 = sphi 0, %s95
      %s96 = sphi 0, %s93
      %s97 = sphi 0, %s96
      %s113 = sphi 0, %s97
    $region4: #{tpu_custom_call.1} parent=1 // loop_header_branch
      %13 = sbr.rel (%p11) target = $region8
    $region5: #{tpu_custom_call.1} parent=1 // loop_body
      %s15 = ssub.s32 %s10, 1
      %s16 = ssub.s32 %s10, 2
      %s17 = sadd.s32 %s10, 1
      %s18 = ssub.s32 %s10, %s17
      %p19 = scmp.eq.s32.totalorder %s18, 0
      %s21 = sadd.s32 %s20, 1
      %s22 = scalar_select %p19, %s20, %s21
      %p25 = pneg %p19
      %p26 = scmp.eq.s32.totalorder %s10, 1
      %p27 = por %p25, %p26
      %p28 = scmp.ne.s32.totalorder %s20, %s23
      %p29 = scmp.eq.s32.totalorder %s10, 0
      %p30 = por %p28, %p29
      %p31 = scmp.ne.s32.totalorder %s20, %s23
      %p32 = scmp.eq.s32.totalorder %s15, 1
      %p33 = por %p31, %p32
      %p34 = scmp.ne.s32.totalorder %s23, %s24
      %p35 = scmp.eq.s32.totalorder %s15, 0
      %p36 = por %p34, %p35
      %p37 = scmp.ne.s32.totalorder %s23, %s24
      %p38 = scmp.eq.s32.totalorder %s16, 1
      %p39 = por %p37, %p38
      %p41 = scmp.ne.s32.totalorder %s24, %s40
      %p42 = scmp.eq.s32.totalorder %s16, 0
      %p43 = por %p41, %p42
      %s45 = sadd.s32 %s44, 1
      %p48 = scmp.eq.s32.totalorder %s10, 1
      %p49 = scmp.ne.s32.totalorder %s44, %s46
      %p50 = scmp.eq.s32.totalorder %s10, 0
      %p51 = por %p49, %p50
      %p52 = scmp.ne.s32.totalorder %s44, %s46
      %p53 = scmp.eq.s32.totalorder %s15, 1
      %p54 = por %p52, %p53
      %p55 = scmp.ne.s32.totalorder %s46, %s47
      %p56 = scmp.eq.s32.totalorder %s15, 0
      %p57 = por %p55, %p56
      %p58 = scmp.ne.s32.totalorder %s46, %s47
      %p59 = scmp.eq.s32.totalorder %s16, 1
      %p60 = por %p58, %p59
      %p62 = scmp.ne.s32.totalorder %s47, %s61
      %p63 = scmp.eq.s32.totalorder %s16, 0
      %p64 = por %p62, %p63
      %s65 = ssub.s32 %s10, %s17
      %p66 = scmp.eq.s32.totalorder %s65, 0
      %s68 = sadd.s32 %s67, 1
      %s69 = scalar_select %p66, %s67, %s68
      %p72 = pneg %p66
      %p73 = scmp.eq.s32.totalorder %s10, 1
      %p74 = por %p72, %p73
      %p75 = scmp.ne.s32.totalorder %s67, %s70
      %p76 = scmp.eq.s32.totalorder %s10, 0
      %p77 = por %p75, %p76
      %p78 = scmp.ne.s32.totalorder %s67, %s70
      %p79 = scmp.eq.s32.totalorder %s15, 1
      %p80 = por %p78, %p79
      %p81 = scmp.ne.s32.totalorder %s70, %s71
      %p82 = scmp.eq.s32.totalorder %s15, 0
      %p83 = por %p81, %p82
      %p84 = scmp.ne.s32.totalorder %s70, %s71
      %p85 = scmp.eq.s32.totalorder %s16, 1
      %p86 = por %p84, %p85
      %p88 = scmp.ne.s32.totalorder %s71, %s87
      %p89 = scmp.eq.s32.totalorder %s16, 0
      %p90 = por %p88, %p89
      %s91 = ssub.s32 %s10, %s17
      %p92 = scmp.eq.s32.totalorder %s91, 0
      %s94 = sadd.s32 %s93, 1
      %s95 = scalar_select %p92, %s93, %s94
      %p98 = pneg %p92
      %p99 = scmp.eq.s32.totalorder %s10, 1
      %p100 = por %p98, %p99
      %p101 = scmp.ne.s32.totalorder %s93, %s96
      %p102 = scmp.eq.s32.totalorder %s10, 0
      %p103 = por %p101, %p102
      %p104 = scmp.ne.s32.totalorder %s93, %s96
      %p105 = scmp.eq.s32.totalorder %s15, 1
      %p106 = por %p104, %p105
      %p107 = scmp.ne.s32.totalorder %s96, %s97
      %p108 = scmp.eq.s32.totalorder %s15, 0
      %p109 = por %p107, %p108
      %p110 = scmp.ne.s32.totalorder %s96, %s97
      %p111 = scmp.eq.s32.totalorder %s16, 1
      %p112 = por %p110, %p111
      %p114 = scmp.ne.s32.totalorder %s97, %s113
      %p115 = scmp.eq.s32.totalorder %s16, 0
      %p116 = por %p114, %p115
      %p117 = scmp.le.s32.totalorder 1, %s10
      %p118 = scmp.lt.s32.totalorder %s10, 3
      %p119 = pnand %p117, %p118
      %p120 = pneg %p119
      // Predicated region
      $region9: #{tpu_custom_call.1} parent=5 // pred_check
        _
      $region10: #{tpu_custom_call.1} parent=5 // pred_check_branch
        %122 = sbr.rel (%p119) target = $region12
      $region11: #{tpu_custom_call.1} parent=5 // pred_region
        %s123 = ssub.s32 %s10, 1
        // Predicated region
        $region13: #{tpu_custom_call.1} parent=11 // pred_check
          %p124 = pneg %p57
        $region14: #{tpu_custom_call.1} parent=11 // pred_check_branch
          %126 = sbr.rel (%p124) target = $region16
        $region15: #{tpu_custom_call.1} parent=11 // pred_region
          _
        $region16: #{tpu_custom_call.1} parent=11 // pred_fallthru
          _
      $region12: #{tpu_custom_call.1} parent=5 // pred_fallthru
        _
      %p127 = scmp.lt.s32.totalorder %s10, 2
      // Predicated region
      $region17: #{tpu_custom_call.1} parent=5 // pred_check
        %p128 = pneg %p127
      $region18: #{tpu_custom_call.1} parent=5 // pred_check_branch
        %130 = sbr.rel (%p128) target = $region20
      $region19: #{tpu_custom_call.1} parent=5 // pred_region
        // Predicated region
        $region21: #{tpu_custom_call.1} parent=19 // pred_check
          %p131 = pneg %p30
        $region22: #{tpu_custom_call.1} parent=19 // pred_check_branch
          %133 = sbr.rel (%p131) target = $region24
        $region23: #{tpu_custom_call.1} parent=19 // pred_region
          %s134 = smul.u32 16, %s10
          %p135 = scmp.lt.s32.totalorder %s134, 31
          %s136 = scalar_select %p135, %s134, 31
          %s137 = smul.addr %s136, 8
          %s138 = scalar_lea.vmem %s0, %s137
          %s139 = smul.u32 16, %s10
        $region24: #{tpu_custom_call.1} parent=19 // pred_fallthru
          _
      $region20: #{tpu_custom_call.1} parent=5 // pred_fallthru
        _
      %p140 = scmp.le.s32.totalorder 1, %s10
      %p141 = scmp.lt.s32.totalorder %s10, 3
      %p142 = pnand %p140, %p141
      %p143 = pneg %p142
      // Predicated region
      $region25: #{tpu_custom_call.1} parent=5 // pred_check
        _
      $region26: #{tpu_custom_call.1} parent=5 // pred_check_branch
        %145 = sbr.rel (%p142) target = $region28
      $region27: #{tpu_custom_call.1} parent=5 // pred_region
        %s146 = ssub.s32 %s10, 1
        %s147 = smul.u32 16, %s15
        %p148 = scmp.lt.s32.totalorder %s147, 31
        %s149 = scalar_select %p148, %s147, 31
        %s150 = smul.addr %s149, 8
        %s151 = scalar_lea.vmem %s0, %s150
        %p152 = pneg %p36
        %p153 = pneg %p33
        %p154 = pneg %p57
        %p155 = pneg %p54
        %p156 = pneg %p83
        %p157 = pneg %p80
        %s158 = sand.u32 %s70, 1
        %s159 = sand.u32 %s70, 1
        %s160 = smul.addr %s159, 128
        %s161 = scalar_lea.vmem [#allocation2], %s160
        %p162 = pneg %p109
        %p163 = pneg %p106
        %s164 = smul.u32 16, %s15
        %p165 = scmp.lt.s32.totalorder %s164, 31
        %s166 = scalar_select %p165, %s164, 31
        %s167 = smul.addr %s166, 8
        %s168 = scalar_lea.vmem %s3, %s167
        %s169 = smul.u32 16, %s15
        %p170 = scmp.lt.s32.totalorder %s169, 31
        %s171 = scalar_select %p170, %s169, 31
        %s172 = smul.addr %s171, 8
        %s173 = scalar_lea.vmem %s0, %s172
        %s174 = smul.u32 16, %s15
        %s175 = smul.u32 16, %s15
        %s176 = smul.u32 16, %s15
        %p177 = scmp.lt.s32.totalorder %s176, 31
        %s178 = scalar_select %p177, %s176, 31
        %s179 = smul.addr %s178, 8
        %s180 = scalar_lea.vmem %s3, %s179
        %s181 = smul.u32 16, %s15
        %v183 = vld [vmem:[%s173] sm:$0xff]
        %v184 = vld [vmem:[%s173 + $0x8] sm:$0xff]
        %v185 = vld [vmem:[%s173 + $0x10] sm:$0xff]
        %v186 = vld [vmem:[%s173 + $0x18] sm:$0xff]
        %v187 = vld [vmem:[%s173 + $0x20] sm:$0xff]
        %v188 = vld [vmem:[%s173 + $0x28] sm:$0xff]
        %v189 = vld [vmem:[%s173 + $0x30] sm:$0xff]
        %v190 = vld [vmem:[%s173 + $0x38] sm:$0xff]
        %v191 = vld [vmem:[%s173 + $0x40] sm:$0xff]
        %v192 = vld [vmem:[%s173 + $0x48] sm:$0xff]
        %v193 = vld [vmem:[%s173 + $0x50] sm:$0xff]
        %v194 = vld [vmem:[%s173 + $0x58] sm:$0xff]
        %v195 = vld [vmem:[%s173 + $0x60] sm:$0xff]
        %v196 = vld [vmem:[%s173 + $0x68] sm:$0xff]
        %v197 = vld [vmem:[%s173 + $0x70] sm:$0xff]
        %v198 = vld [vmem:[%s173 + $0x78] sm:$0xff]
        %v199 = vpack.c.bf16 %v184, %v183
        %v200 = vpack.c.bf16 %v186, %v185
        %v201 = vpack.c.bf16 %v188, %v187
        %v202 = vpack.c.bf16 %v190, %v189
        %v203 = vpack.c.bf16 %v192, %v191
        %v204 = vpack.c.bf16 %v194, %v193
        %v205 = vpack.c.bf16 %v196, %v195
        %v206 = vpack.c.bf16 %v198, %v197
        %v207 = vld [vmem:[%s1] sm:$0x3]
        %vm208 = vcmask 31744
        %v210 = vsel %vm208, %v199, 0
        %v213 = vsel %vm208, %v200, 0
        %v216 = vsel %vm208, %v201, 0
        %v219 = vsel %vm208, %v202, 0
        %v222 = vsel %vm208, %v203, 0
        %v225 = vsel %vm208, %v204, 0
        %v228 = vsel %vm208, %v205, 0
        %v231 = vsel %vm208, %v206, 0
        %vm233 = vcmask 1041408
        %v235 = vsel %vm233, %v207, 0
        %237 = vmatprep.subr.bf16.mxu0 0
        %238 = vmatpush1.bf16.msra.mxu0 %v235
        %239 = vmatprep.subr.bf16.mxu0 0
        %240 = vmatpush1.bf16.msra.mxu0 0
        %241 = vmatprep.subr.bf16.mxu0 0
        %242 = vmatpush1.bf16.msra.mxu0 0
        %243 = vmatprep.subr.bf16.mxu0 0
        %244 = vmatpush1.bf16.msra.mxu0 0
        %245 = vmatprep.subr.bf16.mxu0 0
        %246 = vmatpush1.bf16.msra.mxu0 0
        %247 = vmatprep.subr.bf16.mxu0 0
        %248 = vmatpush1.bf16.msra.mxu0 0
        %249 = vmatprep.subr.bf16.mxu0 0
        %250 = vmatpush1.bf16.msra.mxu0 0
        %251 = vmatprep.subr.bf16.mxu0 0
        %252 = vmatpush1.bf16.msra.mxu0 0
        %253 = vmatprep.subr.bf16.mxu0 0
        %254 = vmatpush1.bf16.msra.mxu0 0
        %255 = vmatprep.subr.bf16.mxu0 0
        %256 = vmatpush1.bf16.msra.mxu0 0
        %257 = vmatprep.subr.bf16.mxu0 0
        %258 = vmatpush1.bf16.msra.mxu0 0
        %259 = vmatprep.subr.bf16.mxu0 0
        %260 = vmatpush1.bf16.msra.mxu0 0
        %261 = vmatprep.subr.bf16.mxu0 0
        %262 = vmatpush1.bf16.msra.mxu0 0
        %263 = vmatprep.subr.bf16.mxu0 0
        %264 = vmatpush1.bf16.msra.mxu0 0
        %265 = vmatprep.subr.bf16.mxu0 0
        %266 = vmatpush1.bf16.msra.mxu0 0
        %267 = vmatprep.subr.bf16.mxu0 0
        %268 = vmatpush1.bf16.msra.mxu0 0
        %269 = vmatprep.mubr.bf16.mxu0 0
        %270 = vmatmul.mubr.bf16.gmra.mrb[0].mxu0 %v210
        %v271 = vpop.f32.mrb[0].mxu0
        %v272 = vadd.f32 0.0, %v271
        %v273 = vpop.f32.mrb[0].mxu0
        %v274 = vpop.f32.mrb[0].mxu0
        %v275 = vadd.f32 0.0, %v274
        %v276 = vpop.f32.mrb[0].mxu0
        %277 = vmatprep.mubr.bf16.mxu0 0
        %278 = vmatmul.mubr.bf16.gmra.mrb[0].mxu0 %v213
        %v279 = vpop.f32.mrb[0].mxu0
        %v280 = vadd.f32 0.0, %v279
        %v281 = vpop.f32.mrb[0].mxu0
        %v282 = vpop.f32.mrb[0].mxu0
        %v283 = vadd.f32 0.0, %v282
        %v284 = vpop.f32.mrb[0].mxu0
        %285 = vmatprep.mubr.bf16.mxu0 0
        %286 = vmatmul.mubr.bf16.gmra.mrb[0].mxu0 %v216
        %v287 = vpop.f32.mrb[0].mxu0
        %v288 = vadd.f32 0.0, %v287
        %v289 = vpop.f32.mrb[0].mxu0
        %v290 = vpop.f32.mrb[0].mxu0
        %v291 = vadd.f32 0.0, %v290
        %v292 = vpop.f32.mrb[0].mxu0
        %293 = vmatprep.mubr.bf16.mxu0 0
        %294 = vmatmul.mubr.bf16.gmra.mrb[0].mxu0 %v219
        %v295 = vpop.f32.mrb[0].mxu0
        %v296 = vadd.f32 0.0, %v295
        %v297 = vpop.f32.mrb[0].mxu0
        %v298 = vpop.f32.mrb[0].mxu0
        %v299 = vadd.f32 0.0, %v298
        %v300 = vpop.f32.mrb[0].mxu0
        %301 = vmatprep.mubr.bf16.mxu0 0
        %302 = vmatmul.mubr.bf16.gmra.mrb[0].mxu0 %v222
        %v303 = vpop.f32.mrb[0].mxu0
        %v304 = vadd.f32 0.0, %v303
        %v305 = vpop.f32.mrb[0].mxu0
        %v306 = vpop.f32.mrb[0].mxu0
        %v307 = vadd.f32 0.0, %v306
        %v308 = vpop.f32.mrb[0].mxu0
        %309 = vmatprep.mubr.bf16.mxu0 0
        %310 = vmatmul.mubr.bf16.gmra.mrb[0].mxu0 %v225
        %v311 = vpop.f32.mrb[0].mxu0
        %v312 = vadd.f32 0.0, %v311
        %v313 = vpop.f32.mrb[0].mxu0
        %v314 = vpop.f32.mrb[0].mxu0
        %v315 = vadd.f32 0.0, %v314
        %v316 = vpop.f32.mrb[0].mxu0
        %317 = vmatprep.mubr.bf16.mxu0 0
        %318 = vmatmul.mubr.bf16.gmra.mrb[0].mxu0 %v228
        %v319 = vpop.f32.mrb[0].mxu0
        %v320 = vadd.f32 0.0, %v319
        %v321 = vpop.f32.mrb[0].mxu0
        %v322 = vpop.f32.mrb[0].mxu0
        %v323 = vadd.f32 0.0, %v322
        %v324 = vpop.f32.mrb[0].mxu0
        %325 = vmatprep.mubr.bf16.mxu0 0
        %326 = vmatmul.mubr.bf16.gmra.mrb[0].mxu0 %v231
        %v327 = vpop.f32.mrb[0].mxu0
        %v328 = vadd.f32 0.0, %v327
        %v329 = vpop.f32.mrb[0].mxu0
        %v330 = vpop.f32.mrb[0].mxu0
        %v331 = vadd.f32 0.0, %v330
        %v332 = vpop.f32.mrb[0].mxu0
        %333 = vdwg.mxu0
        %v334 = vpack.c.bf16 %v275, %v272
        %v335 = vpack.c.bf16 %v283, %v280
        %v336 = vpack.c.bf16 %v291, %v288
        %v337 = vpack.c.bf16 %v299, %v296
        %v338 = vpack.c.bf16 %v307, %v304
        %v339 = vpack.c.bf16 %v315, %v312
        %v340 = vpack.c.bf16 %v323, %v320
        %v341 = vpack.c.bf16 %v331, %v328
        %v350 = vunpack.c.l.b16 %v334
        %v351 = vunpack.c.h.b16 %v334
        %v352 = vunpack.c.l.b16 %v335
        %v353 = vunpack.c.h.b16 %v335
        %v354 = vunpack.c.l.b16 %v336
        %v355 = vunpack.c.h.b16 %v336
        %v356 = vunpack.c.l.b16 %v337
        %v357 = vunpack.c.h.b16 %v337
        %v358 = vunpack.c.l.b16 %v338
        %v359 = vunpack.c.h.b16 %v338
        %v360 = vunpack.c.l.b16 %v339
        %v361 = vunpack.c.h.b16 %v339
        %v362 = vunpack.c.l.b16 %v340
        %v363 = vunpack.c.h.b16 %v340
        %v364 = vunpack.c.l.b16 %v341
        %v365 = vunpack.c.h.b16 %v341
        %v366 = vpack.c.b16 %v350, %v350
        %v367 = vpack.c.b16 %v351, %v351
        %v368 = vpack.c.b16 %v352, %v352
        %v369 = vpack.c.b16 %v353, %v353
        %v370 = vpack.c.b16 %v354, %v354
        %v371 = vpack.c.b16 %v355, %v355
        %v372 = vpack.c.b16 %v356, %v356
        %v373 = vpack.c.b16 %v357, %v357
        %v374 = vpack.c.b16 %v358, %v358
        %v375 = vpack.c.b16 %v359, %v359
        %v376 = vpack.c.b16 %v360, %v360
        %v377 = vpack.c.b16 %v361, %v361
        %v378 = vpack.c.b16 %v362, %v362
        %v379 = vpack.c.b16 %v363, %v363
        %v380 = vpack.c.b16 %v364, %v364
        %v381 = vpack.c.b16 %v365, %v365
        %vm398 = vcmask 60416
        %399 = vst.msk [vmem:[%s161] sm:$0xf] %vm398, %v366
        %400 = vst.msk [vmem:[%s161 + $0x4] sm:$0xf] %vm398, %v367
        %401 = vst.msk [vmem:[%s161 + $0x8] sm:$0xf] %vm398, %v368
        %402 = vst.msk [vmem:[%s161 + $0xc] sm:$0xf] %vm398, %v369
        %403 = vst.msk [vmem:[%s161 + $0x10] sm:$0xf] %vm398, %v370
        %404 = vst.msk [vmem:[%s161 + $0x14] sm:$0xf] %vm398, %v371
        %405 = vst.msk [vmem:[%s161 + $0x18] sm:$0xf] %vm398, %v372
        %406 = vst.msk [vmem:[%s161 + $0x1c] sm:$0xf] %vm398, %v373
        %407 = vst.msk [vmem:[%s161 + $0x20] sm:$0xf] %vm398, %v374
        %408 = vst.msk [vmem:[%s161 + $0x24] sm:$0xf] %vm398, %v375
        %409 = vst.msk [vmem:[%s161 + $0x28] sm:$0xf] %vm398, %v376
        %410 = vst.msk [vmem:[%s161 + $0x2c] sm:$0xf] %vm398, %v377
        %411 = vst.msk [vmem:[%s161 + $0x30] sm:$0xf] %vm398, %v378
        %412 = vst.msk [vmem:[%s161 + $0x34] sm:$0xf] %vm398, %v379
        %413 = vst.msk [vmem:[%s161 + $0x38] sm:$0xf] %vm398, %v380
        %414 = vst.msk [vmem:[%s161 + $0x3c] sm:$0xf] %vm398, %v381
        %415 = vrot.lane.b32.xlu0 %v366, 120
        %v416 = vpop.permute.xlu0 %415
        %417 = vrot.lane.b32.xlu0 %v367, 120
        %v418 = vpop.permute.xlu0 %417
        %419 = vrot.lane.b32.xlu0 %v368, 120
        %v420 = vpop.permute.xlu0 %419
        %421 = vrot.lane.b32.xlu0 %v369, 120
        %v422 = vpop.permute.xlu0 %421
        %423 = vrot.lane.b32.xlu0 %v370, 120
        %v424 = vpop.permute.xlu0 %423
        %425 = vrot.lane.b32.xlu0 %v371, 120
        %v426 = vpop.permute.xlu0 %425
        %427 = vrot.lane.b32.xlu0 %v372, 120
        %v428 = vpop.permute.xlu0 %427
        %429 = vrot.lane.b32.xlu0 %v373, 120
        %v430 = vpop.permute.xlu0 %429
        %431 = vrot.lane.b32.xlu0 %v374, 120
        %v432 = vpop.permute.xlu0 %431
        %433 = vrot.lane.b32.xlu0 %v375, 120
        %v434 = vpop.permute.xlu0 %433
        %435 = vrot.lane.b32.xlu0 %v376, 120
        %v436 = vpop.permute.xlu0 %435
        %437 = vrot.lane.b32.xlu0 %v377, 120
        %v438 = vpop.permute.xlu0 %437
        %439 = vrot.lane.b32.xlu0 %v378, 120
        %v440 = vpop.permute.xlu0 %439
        %441 = vrot.lane.b32.xlu0 %v379, 120
        %v442 = vpop.permute.xlu0 %441
        %443 = vrot.lane.b32.xlu0 %v380, 120
        %v444 = vpop.permute.xlu0 %443
        %445 = vrot.lane.b32.xlu0 %v381, 120
        %v446 = vpop.permute.xlu0 %445
        %s463 = scalar_lea.vmem %s161, 64 [#allocation2]
        %464 = vst.msk [vmem:[%s463] sm:$0xf] %vm398, %v416
        %465 = vst.msk [vmem:[%s463 + $0x4] sm:$0xf] %vm398, %v418
        %466 = vst.msk [vmem:[%s463 + $0x8] sm:$0xf] %vm398, %v420
        %467 = vst.msk [vmem:[%s463 + $0xc] sm:$0xf] %vm398, %v422
        %468 = vst.msk [vmem:[%s463 + $0x10] sm:$0xf] %vm398, %v424
        %469 = vst.msk [vmem:[%s463 + $0x14] sm:$0xf] %vm398, %v426
        %470 = vst.msk [vmem:[%s463 + $0x18] sm:$0xf] %vm398, %v428
        %471 = vst.msk [vmem:[%s463 + $0x1c] sm:$0xf] %vm398, %v430
        %472 = vst.msk [vmem:[%s463 + $0x20] sm:$0xf] %vm398, %v432
        %473 = vst.msk [vmem:[%s463 + $0x24] sm:$0xf] %vm398, %v434
        %474 = vst.msk [vmem:[%s463 + $0x28] sm:$0xf] %vm398, %v436
        %475 = vst.msk [vmem:[%s463 + $0x2c] sm:$0xf] %vm398, %v438
        %476 = vst.msk [vmem:[%s463 + $0x30] sm:$0xf] %vm398, %v440
        %477 = vst.msk [vmem:[%s463 + $0x34] sm:$0xf] %vm398, %v442
        %478 = vst.msk [vmem:[%s463 + $0x38] sm:$0xf] %vm398, %v444
        %479 = vst.msk [vmem:[%s463 + $0x3c] sm:$0xf] %vm398, %v446
        %496 = vrot.lane.b32.xlu0 %v272, 112
        %v497 = vpop.permute.xlu0 %496
        %498 = vrot.lane.b32.xlu0 %v275, 112
        %v499 = vpop.permute.xlu0 %498
        %500 = vrot.lane.b32.xlu0 %v280, 112
        %v501 = vpop.permute.xlu0 %500
        %502 = vrot.lane.b32.xlu0 %v283, 112
        %v503 = vpop.permute.xlu0 %502
        %504 = vrot.lane.b32.xlu0 %v288, 112
        %v505 = vpop.permute.xlu0 %504
        %506 = vrot.lane.b32.xlu0 %v291, 112
        %v507 = vpop.permute.xlu0 %506
        %508 = vrot.lane.b32.xlu0 %v296, 112
        %v509 = vpop.permute.xlu0 %508
        %510 = vrot.lane.b32.xlu0 %v299, 112
        %v511 = vpop.permute.xlu0 %510
        %512 = vrot.lane.b32.xlu0 %v304, 112
        %v513 = vpop.permute.xlu0 %512
        %514 = vrot.lane.b32.xlu0 %v307, 112
        %v515 = vpop.permute.xlu0 %514
        %516 = vrot.lane.b32.xlu0 %v312, 112
        %v517 = vpop.permute.xlu0 %516
        %518 = vrot.lane.b32.xlu0 %v315, 112
        %v519 = vpop.permute.xlu0 %518
        %520 = vrot.lane.b32.xlu0 %v320, 112
        %v521 = vpop.permute.xlu0 %520
        %522 = vrot.lane.b32.xlu0 %v323, 112
        %v523 = vpop.permute.xlu0 %522
        %524 = vrot.lane.b32.xlu0 %v328, 112
        %v525 = vpop.permute.xlu0 %524
        %526 = vrot.lane.b32.xlu0 %v331, 112
        %v527 = vpop.permute.xlu0 %526
        %544 = vst.msk [vmem:[%s180] sm:$0xff] %vm208, %v497
        %545 = vst.msk [vmem:[%s180 + $0x8] sm:$0xff] %vm208, %v499
        %546 = vst.msk [vmem:[%s180 + $0x10] sm:$0xff] %vm208, %v501
        %547 = vst.msk [vmem:[%s180 + $0x18] sm:$0xff] %vm208, %v503
        %548 = vst.msk [vmem:[%s180 + $0x20] sm:$0xff] %vm208, %v505
        %549 = vst.msk [vmem:[%s180 + $0x28] sm:$0xff] %vm208, %v507
        %550 = vst.msk [vmem:[%s180 + $0x30] sm:$0xff] %vm208, %v509
        %551 = vst.msk [vmem:[%s180 + $0x38] sm:$0xff] %vm208, %v511
        %552 = vst.msk [vmem:[%s180 + $0x40] sm:$0xff] %vm208, %v513
        %553 = vst.msk [vmem:[%s180 + $0x48] sm:$0xff] %vm208, %v515
        %554 = vst.msk [vmem:[%s180 + $0x50] sm:$0xff] %vm208, %v517
        %555 = vst.msk [vmem:[%s180 + $0x58] sm:$0xff] %vm208, %v519
        %556 = vst.msk [vmem:[%s180 + $0x60] sm:$0xff] %vm208, %v521
        %557 = vst.msk [vmem:[%s180 + $0x68] sm:$0xff] %vm208, %v523
        %558 = vst.msk [vmem:[%s180 + $0x70] sm:$0xff] %vm208, %v525
        %559 = vst.msk [vmem:[%s180 + $0x78] sm:$0xff] %vm208, %v527
        %s560 = sand.u32 %s70, 1
        %s561 = sand.u32 %s70, 1
        %s562 = smul.addr %s561, 128
        %s563 = scalar_lea.vmem [#allocation2], %s562
        %s564 = smul.u32 16, %s15
        %p565 = scmp.lt.s32.totalorder %s564, 31
        %s566 = scalar_select %p565, %s564, 31
        %s567 = smul.addr %s566, 8
        %s568 = scalar_lea.vmem %s3, %s567
        // Predicated region
        $region29: #{tpu_custom_call.1} parent=27 // pred_check
          %p569 = pneg %p80
        $region30: #{tpu_custom_call.1} parent=27 // pred_check_branch
          %571 = sbr.rel (%p569) target = $region32
        $region31: #{tpu_custom_call.1} parent=27 // pred_region
          %s572 = smul.u32 16, %s15
          %s573 = smul.addr %s572, 4
          %s574 = scalar_lea.vmem %s2, %s573
          // Predicated region
          $region33: #{tpu_custom_call.1} parent=31 // pred_check
            _
          $region34: #{tpu_custom_call.1} parent=31 // pred_check_branch
            %576 = sbr.rel (0) target = $region36
          $region35: #{tpu_custom_call.1} parent=31 // pred_region
            // Predicated region
            $region37: #{tpu_custom_call.1} parent=35 // pred_check
              _
            $region38: #{tpu_custom_call.1} parent=35 // pred_check_branch
              %578 = sbr.rel target = $region40
            $region39: #{tpu_custom_call.1} parent=35 // pred_region
              // Predicated region
              $region52: #{tpu_custom_call.1} parent=39 // pred_check
                _
              $region53: #{tpu_custom_call.1} parent=39 // pred_check_branch
                %655 = sbr.rel (0) target = $region55
              $region54: #{tpu_custom_call.1} parent=39 // pred_region
                loop: start=0, step=1, limit=1
                $region56: #{tpu_custom_call.1} parent=54 // loop_pre_header
                  _
                $region57: #{tpu_custom_call.1} parent=54 // loop_header
                  %s657 = sphi 0, %s661
                  %p658 = scmp.ge.s32.totalorder %s657, 1
                  %s662 = sphi %s563, %s563
                  %s663 = sphi %s574, %s574
                $region58: #{tpu_custom_call.1} parent=54 // loop_header_branch
                  %660 = sbr.rel (%p658) target = $region62
                $region59: #{tpu_custom_call.1} parent=54 // loop_body
                  _
                $region60: #{tpu_custom_call.1} parent=54 // loop_footer
                  %s661 = sadd.s32 1, %s657
                $region61: #{tpu_custom_call.1} parent=54 // loop_footer_branch
                  %656 = sbr.rel target = $region57
                $region62: #{tpu_custom_call.1} parent=54 // loop_exit
                  _
                loop: start=0, step=1, limit=1
                $region63: #{tpu_custom_call.1} parent=54 // loop_pre_header
                  _
                $region64: #{tpu_custom_call.1} parent=54 // loop_header
                  %s666 = sphi 0, %s670
                  %p667 = scmp.ge.s32.totalorder %s666, 1
                  %s671 = sphi %s563, %s563
                  %s672 = sphi %s574, %s574
                $region65: #{tpu_custom_call.1} parent=54 // loop_header_branch
                  %669 = sbr.rel (%p667) target = $region69
                $region66: #{tpu_custom_call.1} parent=54 // loop_body
                  %v673 = vld [vmem:[%s671] sm:$0xf]
                  %674 = vst [vmem:[%s672] sm:$0xf] %v673
                  %v675 = vld [vmem:[%s671 + $0x4] sm:$0xf]
                  %676 = vst [vmem:[%s672 + $0x4] sm:$0xf] %v675
                  %v677 = vld [vmem:[%s671 + $0x8] sm:$0xf]
                  %678 = vst [vmem:[%s672 + $0x8] sm:$0xf] %v677
                  %v679 = vld [vmem:[%s671 + $0xc] sm:$0xf]
                  %680 = vst [vmem:[%s672 + $0xc] sm:$0xf] %v679
                  %v681 = vld [vmem:[%s671 + $0x10] sm:$0xf]
                  %682 = vst [vmem:[%s672 + $0x10] sm:$0xf] %v681
                  %v683 = vld [vmem:[%s671 + $0x14] sm:$0xf]
                  %684 = vst [vmem:[%s672 + $0x14] sm:$0xf] %v683
                  %v685 = vld [vmem:[%s671 + $0x18] sm:$0xf]
                  %686 = vst [vmem:[%s672 + $0x18] sm:$0xf] %v685
                  %v687 = vld [vmem:[%s671 + $0x1c] sm:$0xf]
                  %688 = vst [vmem:[%s672 + $0x1c] sm:$0xf] %v687
                  %v689 = vld [vmem:[%s671 + $0x20] sm:$0xf]
                  %690 = vst [vmem:[%s672 + $0x20] sm:$0xf] %v689
                  %v691 = vld [vmem:[%s671 + $0x24] sm:$0xf]
                  %692 = vst [vmem:[%s672 + $0x24] sm:$0xf] %v691
                  %v693 = vld [vmem:[%s671 + $0x28] sm:$0xf]
                  %694 = vst [vmem:[%s672 + $0x28] sm:$0xf] %v693
                  %v695 = vld [vmem:[%s671 + $0x2c] sm:$0xf]
                  %696 = vst [vmem:[%s672 + $0x2c] sm:$0xf] %v695
                  %v697 = vld [vmem:[%s671 + $0x30] sm:$0xf]
                  %698 = vst [vmem:[%s672 + $0x30] sm:$0xf] %v697
                  %v699 = vld [vmem:[%s671 + $0x34] sm:$0xf]
                  %700 = vst [vmem:[%s672 + $0x34] sm:$0xf] %v699
                  %v701 = vld [vmem:[%s671 + $0x38] sm:$0xf]
                  %702 = vst [vmem:[%s672 + $0x38] sm:$0xf] %v701
                  %v703 = vld [vmem:[%s671 + $0x3c] sm:$0xf]
                  %704 = vst [vmem:[%s672 + $0x3c] sm:$0xf] %v703
                  %v705 = vld [vmem:[%s671 + $0x40] sm:$0xf]
                  %706 = vst [vmem:[%s672 + $0x80] sm:$0xf] %v705
                  %v707 = vld [vmem:[%s671 + $0x44] sm:$0xf]
                  %708 = vst [vmem:[%s672 + $0x84] sm:$0xf] %v707
                  %v709 = vld [vmem:[%s671 + $0x48] sm:$0xf]
                  %710 = vst [vmem:[%s672 + $0x88] sm:$0xf] %v709
                  %v711 = vld [vmem:[%s671 + $0x4c] sm:$0xf]
                  %712 = vst [vmem:[%s672 + $0x8c] sm:$0xf] %v711
                  %v713 = vld [vmem:[%s671 + $0x50] sm:$0xf]
                  %714 = vst [vmem:[%s672 + $0x90] sm:$0xf] %v713
                  %v715 = vld [vmem:[%s671 + $0x54] sm:$0xf]
                  %716 = vst [vmem:[%s672 + $0x94] sm:$0xf] %v715
                  %v717 = vld [vmem:[%s671 + $0x58] sm:$0xf]
                  %718 = vst [vmem:[%s672 + $0x98] sm:$0xf] %v717
                  %v719 = vld [vmem:[%s671 + $0x5c] sm:$0xf]
                  %720 = vst [vmem:[%s672 + $0x9c] sm:$0xf] %v719
                  %v721 = vld [vmem:[%s671 + $0x60] sm:$0xf]
                  %722 = vst [vmem:[%s672 + $0xa0] sm:$0xf] %v721
                  %v723 = vld [vmem:[%s671 + $0x64] sm:$0xf]
                  %724 = vst [vmem:[%s672 + $0xa4] sm:$0xf] %v723
                  %v725 = vld [vmem:[%s671 + $0x68] sm:$0xf]
                  %726 = vst [vmem:[%s672 + $0xa8] sm:$0xf] %v725
                  %v727 = vld [vmem:[%s671 + $0x6c] sm:$0xf]
                  %728 = vst [vmem:[%s672 + $0xac] sm:$0xf] %v727
                  %v729 = vld [vmem:[%s671 + $0x70] sm:$0xf]
                  %730 = vst [vmem:[%s672 + $0xb0] sm:$0xf] %v729
                  %v731 = vld [vmem:[%s671 + $0x74] sm:$0xf]
                  %732 = vst [vmem:[%s672 + $0xb4] sm:$0xf] %v731
                  %v733 = vld [vmem:[%s671 + $0x78] sm:$0xf]
                  %734 = vst [vmem:[%s672 + $0xb8] sm:$0xf] %v733
                  %v735 = vld [vmem:[%s671 + $0x7c] sm:$0xf]
                  %736 = vst [vmem:[%s672 + $0xbc] sm:$0xf] %v735
                $region67: #{tpu_custom_call.1} parent=54 // loop_footer
                  %s670 = sadd.s32 1, %s666
                $region68: #{tpu_custom_call.1} parent=54 // loop_footer_branch
                  %665 = sbr.rel target = $region64
                $region69: #{tpu_custom_call.1} parent=54 // loop_exit
                  _
              $region55: #{tpu_custom_call.1} parent=39 // pred_fallthru
                _
            $region40: #{tpu_custom_call.1} parent=35 // pred_fallthru
              _
            // Predicated region
            $region41: #{tpu_custom_call.1} parent=35 // pred_check
              _
            $region42: #{tpu_custom_call.1} parent=35 // pred_check_branch
              %580 = sbr.rel (0) target = $region44
            $region43: #{tpu_custom_call.1} parent=35 // pred_region
              loop: start=0, step=1, limit=1
              $region45: #{tpu_custom_call.1} parent=43 // loop_pre_header
                _
              $region46: #{tpu_custom_call.1} parent=43 // loop_header
                %s583 = sphi 0, %s587
                %p584 = scmp.ge.s32.totalorder %s583, 1
                %s588 = sphi %s563, %s563
                %s589 = sphi %s574, %s574
              $region47: #{tpu_custom_call.1} parent=43 // loop_header_branch
                %586 = sbr.rel (%p584) target = $region51
              $region48: #{tpu_custom_call.1} parent=43 // loop_body
                %v590 = vld [vmem:[%s588] sm:$0xf]
                %591 = vst [vmem:[%s589] sm:$0xf] %v590
                %v592 = vld [vmem:[%s588 + $0x4] sm:$0xf]
                %593 = vst [vmem:[%s589 + $0x4] sm:$0xf] %v592
                %v594 = vld [vmem:[%s588 + $0x8] sm:$0xf]
                %595 = vst [vmem:[%s589 + $0x8] sm:$0xf] %v594
                %v596 = vld [vmem:[%s588 + $0xc] sm:$0xf]
                %597 = vst [vmem:[%s589 + $0xc] sm:$0xf] %v596
                %v598 = vld [vmem:[%s588 + $0x10] sm:$0xf]
                %599 = vst [vmem:[%s589 + $0x10] sm:$0xf] %v598
                %v600 = vld [vmem:[%s588 + $0x14] sm:$0xf]
                %601 = vst [vmem:[%s589 + $0x14] sm:$0xf] %v600
                %v602 = vld [vmem:[%s588 + $0x18] sm:$0xf]
                %603 = vst [vmem:[%s589 + $0x18] sm:$0xf] %v602
                %v604 = vld [vmem:[%s588 + $0x1c] sm:$0xf]
                %605 = vst [vmem:[%s589 + $0x1c] sm:$0xf] %v604
                %v606 = vld [vmem:[%s588 + $0x20] sm:$0xf]
                %607 = vst [vmem:[%s589 + $0x20] sm:$0xf] %v606
                %v608 = vld [vmem:[%s588 + $0x24] sm:$0xf]
                %609 = vst [vmem:[%s589 + $0x24] sm:$0xf] %v608
                %v610 = vld [vmem:[%s588 + $0x28] sm:$0xf]
                %611 = vst [vmem:[%s589 + $0x28] sm:$0xf] %v610
                %v612 = vld [vmem:[%s588 + $0x2c] sm:$0xf]
                %613 = vst [vmem:[%s589 + $0x2c] sm:$0xf] %v612
                %v614 = vld [vmem:[%s588 + $0x30] sm:$0xf]
                %615 = vst [vmem:[%s589 + $0x30] sm:$0xf] %v614
                %v616 = vld [vmem:[%s588 + $0x34] sm:$0xf]
                %617 = vst [vmem:[%s589 + $0x34] sm:$0xf] %v616
                %v618 = vld [vmem:[%s588 + $0x38] sm:$0xf]
                %619 = vst [vmem:[%s589 + $0x38] sm:$0xf] %v618
                %v620 = vld [vmem:[%s588 + $0x3c] sm:$0xf]
                %621 = vst [vmem:[%s589 + $0x3c] sm:$0xf] %v620
                %v622 = vld [vmem:[%s588 + $0x40] sm:$0xf]
                %623 = vst [vmem:[%s589 + $0x80] sm:$0xf] %v622
                %v624 = vld [vmem:[%s588 + $0x44] sm:$0xf]
                %625 = vst [vmem:[%s589 + $0x84] sm:$0xf] %v624
                %v626 = vld [vmem:[%s588 + $0x48] sm:$0xf]
                %627 = vst [vmem:[%s589 + $0x88] sm:$0xf] %v626
                %v628 = vld [vmem:[%s588 + $0x4c] sm:$0xf]
                %629 = vst [vmem:[%s589 + $0x8c] sm:$0xf] %v628
                %v630 = vld [vmem:[%s588 + $0x50] sm:$0xf]
                %631 = vst [vmem:[%s589 + $0x90] sm:$0xf] %v630
                %v632 = vld [vmem:[%s588 + $0x54] sm:$0xf]
                %633 = vst [vmem:[%s589 + $0x94] sm:$0xf] %v632
                %v634 = vld [vmem:[%s588 + $0x58] sm:$0xf]
                %635 = vst [vmem:[%s589 + $0x98] sm:$0xf] %v634
                %v636 = vld [vmem:[%s588 + $0x5c] sm:$0xf]
                %637 = vst [vmem:[%s589 + $0x9c] sm:$0xf] %v636
                %v638 = vld [vmem:[%s588 + $0x60] sm:$0xf]
                %639 = vst [vmem:[%s589 + $0xa0] sm:$0xf] %v638
                %v640 = vld [vmem:[%s588 + $0x64] sm:$0xf]
                %641 = vst [vmem:[%s589 + $0xa4] sm:$0xf] %v640
                %v642 = vld [vmem:[%s588 + $0x68] sm:$0xf]
                %643 = vst [vmem:[%s589 + $0xa8] sm:$0xf] %v642
                %v644 = vld [vmem:[%s588 + $0x6c] sm:$0xf]
                %645 = vst [vmem:[%s589 + $0xac] sm:$0xf] %v644
                %v646 = vld [vmem:[%s588 + $0x70] sm:$0xf]
                %647 = vst [vmem:[%s589 + $0xb0] sm:$0xf] %v646
                %v648 = vld [vmem:[%s588 + $0x74] sm:$0xf]
                %649 = vst [vmem:[%s589 + $0xb4] sm:$0xf] %v648
                %v650 = vld [vmem:[%s588 + $0x78] sm:$0xf]
                %651 = vst [vmem:[%s589 + $0xb8] sm:$0xf] %v650
                %v652 = vld [vmem:[%s588 + $0x7c] sm:$0xf]
                %653 = vst [vmem:[%s589 + $0xbc] sm:$0xf] %v652
              $region49: #{tpu_custom_call.1} parent=43 // loop_footer
                %s587 = sadd.s32 1, %s583
              $region50: #{tpu_custom_call.1} parent=43 // loop_footer_branch
                %582 = sbr.rel target = $region46
              $region51: #{tpu_custom_call.1} parent=43 // loop_exit
                _
            $region44: #{tpu_custom_call.1} parent=35 // pred_fallthru
              _
          $region36: #{tpu_custom_call.1} parent=31 // pred_fallthru
            _
          %737 = vnop
        $region32: #{tpu_custom_call.1} parent=27 // pred_fallthru
          _
        // Predicated region
        $region70: #{tpu_custom_call.1} parent=27 // pred_check
          %p738 = pneg %p106
        $region71: #{tpu_custom_call.1} parent=27 // pred_check_branch
          %740 = sbr.rel (%p738) target = $region73
        $region72: #{tpu_custom_call.1} parent=27 // pred_region
          %s741 = smul.u32 16, %s15
        $region73: #{tpu_custom_call.1} parent=27 // pred_fallthru
          _
      $region28: #{tpu_custom_call.1} parent=5 // pred_fallthru
        _
      %p742 = scmp.le.s32.totalorder 2, %s10
      // Predicated region
      $region74: #{tpu_custom_call.1} parent=5 // pred_check
        %p743 = pneg %p742
      $region75: #{tpu_custom_call.1} parent=5 // pred_check_branch
        %745 = sbr.rel (%p743) target = $region77
      $region76: #{tpu_custom_call.1} parent=5 // pred_region
        %s746 = ssub.s32 %s10, 2
        // Predicated region
        $region78: #{tpu_custom_call.1} parent=76 // pred_check
          %p747 = pneg %p86
        $region79: #{tpu_custom_call.1} parent=76 // pred_check_branch
          %749 = sbr.rel (%p747) target = $region81
        $region80: #{tpu_custom_call.1} parent=76 // pred_region
          %s750 = sand.u32 %s71, 1
          %s751 = sand.u32 %s71, 1
          %s752 = smul.addr %s751, 128
          %s753 = scalar_lea.vmem [#allocation2], %s752
        $region81: #{tpu_custom_call.1} parent=76 // pred_fallthru
          _
        // Predicated region
        $region82: #{tpu_custom_call.1} parent=76 // pred_check
          %p754 = pneg %p112
        $region83: #{tpu_custom_call.1} parent=76 // pred_check_branch
          %756 = sbr.rel (%p754) target = $region85
        $region84: #{tpu_custom_call.1} parent=76 // pred_region
          %s757 = smul.u32 16, %s16
          %p758 = scmp.lt.s32.totalorder %s757, 31
          %s759 = scalar_select %p758, %s757, 31
          %s760 = smul.addr %s759, 8
          %s761 = scalar_lea.vmem %s3, %s760
        $region85: #{tpu_custom_call.1} parent=76 // pred_fallthru
          _
      $region77: #{tpu_custom_call.1} parent=5 // pred_fallthru
        _
    $region6: #{tpu_custom_call.1} parent=1 // loop_footer
      %s14 = sadd.s32 1, %s10
    $region7: #{tpu_custom_call.1} parent=1 // loop_footer_branch
      %9 = sbr.rel target = $region3
    $region8: #{tpu_custom_call.1} parent=1 // loop_exit
      _

</llo_original>
